<compile_context>
chip_gen: v7x
topology: tpu7x:2x2x1
jax: 0.10.0
libtpu: 0.0.40
codegen_flags: <defaults>
</compile_context>

<pallas_src>
import jax
import jax.numpy as jnp
from jax.experimental import pallas as pl
from jax.experimental.pallas import tpu as pltpu


def _sublane_pack(dtype) -> int:
    """Sublane packing factor: 8 rows for 32-bit, 16 for 16-bit, 32 for 8-bit."""
    itemsize = jnp.dtype(dtype).itemsize
    return max(8, 32 // max(1, itemsize))


def _vmem_capacity_bytes() -> int:
    """Best-effort query of per-core VMEM capacity; conservative (v7x) fallback."""
    try:
        info = pltpu.get_tpu_info()
        cap = getattr(info, "vmem_capacity_bytes", None)
        if cap:
            return int(cap)
    except Exception:
        pass
    return 64 << 20


def _pick_cblk(C: int, pack: int, max_unroll: int = 32) -> int:
    """Channels per block: a divisor of C, preferably all of C or a
    packed-sublane multiple, capped so the in-register reorder stays a short
    statically bounded unroll."""
    cap = min(C, max_unroll)
    divisors = [d for d in range(1, C + 1) if C % d == 0 and d <= cap]
    friendly = [d for d in divisors if d == C or d % pack == 0]
    pool = friendly if friendly else divisors
    return max(pool)


def _padded_tile_bytes(nblk: int, cblk: int, HW: int, pack: int, itemsize: int) -> int:
    """VMEM footprint of one (nblk, cblk, HW) tile after (pack, 128) padding."""
    pc = -(-cblk // pack) * pack
    phw = -(-HW // 128) * 128
    return nblk * pc * phw * itemsize


def _make_flip_kernel(cblk: int):
    """One (nblk, cblk, HW) tile: dense load, in-register channel reversal,
    dense store.  Combined with the reversed channel-block index_map this
    realizes exactly torch.flip(x, [1])."""

    def kernel(x_ref, o_ref):
        v = x_ref[...]  # one dense tile load
        if cblk > 1:
            # In-register reorder (sublane moves on the XLU, which is idle in
            # this memory-bound kernel); guaranteed to lower (no lax.rev).
            v = jnp.concatenate(
                [v[:, j:j + 1, :] for j in range(cblk - 1, -1, -1)], axis=1)
        o_ref[...] = v  # one dense tile store

    return kernel


def feature_flip_block(x, axis: int = 1):
    """Pallas equivalent of FeatureFlipBlock.forward: torch.flip(x, [1]) on NCHW."""
    assert x.ndim == 4, "expected NCHW input"
    assert axis in (1, -3), "this kernel implements the module default axis=1 (channels)"
    # TODO(synk): generalize to other flip axes by moving the flip axis to
    # position 1 in the wrapper (pure layout plumbing).

    N, C, H, W = x.shape
    HW = H * W
    itemsize = jnp.dtype(x.dtype).itemsize
    pack = _sublane_pack(x.dtype)

    vmem_cap = _vmem_capacity_bytes()
    # Generation-aware tile target; keep the double-buffered resident set
    # (2 arrays x 2 buffers x tile) well under half of VMEM.
    target_tile_bytes = (4 << 20) if vmem_cap >= (100 << 20) else (2 << 20)
    max_tile_bytes = vmem_cap // 8

    cblk = _pick_cblk(C, pack)
    n_cblocks = C // cblk

    # Images per block: fill the tile-byte target, capped by N and by VMEM.
    per_block_bytes = max(1, cblk * HW * itemsize)
    nblk = max(1, min(N, target_tile_bytes // per_block_bytes))
    while nblk > 1 and _padded_tile_bytes(nblk, cblk, HW, pack, itemsize) > max_tile_bytes:
        nblk //= 2

    # Keep a few grid steps alive for megacore sharding / DMA overlap, unless
    # shrinking would make the tiles tiny (whole problem is small anyway).
    def _steps(nb):
        return pl.cdiv(N, nb) * n_cblocks

    while nblk > 1 and _steps(nblk) < 4 and (nblk // 2) * per_block_bytes >= (512 << 10):
        nblk //= 2
    # TODO(synk): if a single (1, cblk, HW) block still exceeds the VMEM budget
    # (enormous H*W), additionally block the H*W axis.

    n_nblocks = pl.cdiv(N, nblk)

    # Lane-dense 3D view; merging trailing dims of a contiguous array is free.
    x3 = x.reshape(N, C, HW)

    tile_bytes = _padded_tile_bytes(nblk, cblk, HW, pack, itemsize)
    vmem_limit = int(min(max(4 * tile_bytes + (4 << 20), 16 << 20), vmem_cap * 3 // 4))

    # Output channel-block cb reads input channel-block (n_cblocks-1-cb); the
    # in-block reversal inside the kernel completes the exact flip permutation.
    in_spec = pl.BlockSpec((nblk, cblk, HW),
                           lambda n, cb: (n, n_cblocks - 1 - cb, 0))
    out_spec = pl.BlockSpec((nblk, cblk, HW),
                            lambda n, cb: (n, cb, 0))

    out3 = pl.pallas_call(
        _make_flip_kernel(cblk),
        out_shape=jax.ShapeDtypeStruct((N, C, HW), x.dtype),
        grid=(n_nblocks, n_cblocks),
        in_specs=[in_spec],
        out_specs=out_spec,
        compiler_params=pltpu.CompilerParams(
            dimension_semantics=("parallel", "parallel"),
            vmem_limit_bytes=vmem_limit,
        ),
        cost_estimate=pl.CostEstimate(
            flops=0,
            transcendentals=0,
            bytes_accessed=2 * N * C * HW * itemsize,
        ),
    )(x3)

    return out3.reshape(N, C, H, W)


if __name__ == "__main__":
    key = jax.random.PRNGKey(0)
    # Small NCHW input consistent with the module's expected conv-feature input.
    x = jax.random.normal(key, (2, 4, 16, 16), dtype=jnp.float32)

    out = feature_flip_block(x, axis=1)
    out = jax.block_until_ready(out)

    # Verify against the pure-JAX reference (torch.flip(x, [1]) == jnp.flip(x, 1)).
    ref = jnp.flip(x, axis=1)
    assert out.shape == ref.shape and out.dtype == ref.dtype
    assert bool(jnp.array_equal(out, ref))

    print("KERNEL_OK")
</pallas_src>

<mosaic_0001>
module attributes {stable_mosaic.version = 11 : i64} {
  func.func @kernel(%arg0: i32, %arg1: i32, %arg2: memref<2x4x256xf32, #tpu.memory_space<vmem>>, %arg3: memref<2x4x256xf32, #tpu.memory_space<vmem>>) attributes {dimension_semantics = [#tpu.dimension_semantics<parallel>, #tpu.dimension_semantics<parallel>], iteration_bounds = array<i64: 1, 1>, scalar_prefetch = 0 : i64, scratch_operands = 0 : i64, tpu.core_type = #tpu.core_type<tc>, window_params = [{transform_indices = @transform_0, window_bounds = array<i64: 2, 4, 256>}, {transform_indices = @transform_1, window_bounds = array<i64: 2, 4, 256>}]} {
    %c0 = arith.constant 0 : index
    %c0_0 = arith.constant 0 : index
    %c0_1 = arith.constant 0 : index
    %0 = vector.load %arg2[%c0, %c0_0, %c0_1] : memref<2x4x256xf32, #tpu.memory_space<vmem>>, vector<2x4x256xf32>
    %1 = vector.extract_strided_slice %0 {offsets = [0, 3, 0], sizes = [2, 1, 256], strides = [1, 1, 1]} : vector<2x4x256xf32> to vector<2x1x256xf32>
    %2 = vector.extract_strided_slice %0 {offsets = [0, 2, 0], sizes = [2, 1, 256], strides = [1, 1, 1]} : vector<2x4x256xf32> to vector<2x1x256xf32>
    %3 = vector.extract_strided_slice %0 {offsets = [0, 1, 0], sizes = [2, 1, 256], strides = [1, 1, 1]} : vector<2x4x256xf32> to vector<2x1x256xf32>
    %4 = vector.extract_strided_slice %0 {offsets = [0, 0, 0], sizes = [2, 1, 256], strides = [1, 1, 1]} : vector<2x4x256xf32> to vector<2x1x256xf32>
    %5 = tpu.concatenate %1, %2, %3, %4 in 1 : vector<2x1x256xf32>, vector<2x1x256xf32>, vector<2x1x256xf32>, vector<2x1x256xf32> -> vector<2x4x256xf32>
    %c0_2 = arith.constant 0 : index
    %c0_3 = arith.constant 0 : index
    %c0_4 = arith.constant 0 : index
    %6 = vector.load %arg3[%c0_2, %c0_3, %c0_4] : memref<2x4x256xf32, #tpu.memory_space<vmem>>, vector<2x4x256xf32>
    tpu.vector_store %arg3[%c0_2, %c0_3, %c0_4], %5 {strides = array<i32>} : memref<2x4x256xf32, #tpu.memory_space<vmem>>, vector<2x4x256xf32>,
    return
  }
  func.func @transform_0(%arg0: i32, %arg1: i32) -> (i32, i32, i32) {
    %c0_i32 = arith.constant 0 : i32
    %0 = arith.subi %c0_i32, %arg1 : i32
    %c0_i32_0 = arith.constant 0 : i32
    %c0_i32_1 = arith.constant 0 : i32
    return %arg0, %0, %c0_i32_0 : i32, i32, i32
  }
  func.func @transform_1(%arg0: i32, %arg1: i32) -> (i32, i32, i32) {
    %c0_i32 = arith.constant 0 : i32
    %c0_i32_0 = arith.constant 0 : i32
    return %arg0, %arg1, %c0_i32 : i32, i32, i32
  }
}

</mosaic_0001>

<llo_original>
// kernel: tpu_custom_call.1
$region0: #{tpu_custom_call.1}
  #allocation0 [shape = 'u32[]', space=smem, size = 0x4, offset = 0x4, fixed_abs, tag = 'smem constant byte address 0x4 - core index']
  #allocation1 [shape = 'u32[144,128]{1,0:T(1,128)}', space=vmem, size = 0x12000, scoped, tag = 'internal scratch']
  %s0 = inlined_call_operand.hbm [shape: f32[2,4,256], index: 0, kind: input, shape index: {}]
  %s1 = inlined_call_operand.hbm [shape: f32[2,4,256], index: 1, kind: output, shape index: {}]
  %s2 = sld [smem:[#allocation0]]
  $region18: #{tpu_custom_call.1} parent=0
    _
  %s4 = ssub.s32 1, %s2
  %s5 = scalar_select 0, %s4, %s2
  $region1: #{tpu_custom_call.1} parent=0
    #allocation2 [shape = 'u8[8192]{0}', space=vmem, size = 0x2000, scoped, tag = 'input window, operand 0, single buffered']
    #allocation3 [shape = 's32[1]{0}', space=sflag, size = 0x4, scoped, tag = 'scoped memory for tpu_custom_call.1']
    #allocation4 [shape = 's32[1]{0}', space=sflag, size = 0x4, scoped, tag = 'scoped memory for tpu_custom_call.1']
    #allocation5 [shape = 'u8[8192]{0}', space=vmem, size = 0x2000, scoped, tag = 'output window, operand 0, single buffered']
    %6 = vsyncpa [#allocation3], 0
    %7 = vsyncpa [#allocation4], 0
    // Predicated region
    $region2: #{tpu_custom_call.1} parent=1 // pred_check
      _
    $region3: #{tpu_custom_call.1} parent=1 // pred_check_branch
      %9 = sbr.rel (0) target = $region5
    $region4: #{tpu_custom_call.1} parent=1 // pred_region
      %s10 = ssub.s32 0, 0
      %s12 = ssub.s32 256, 256
      %13 = vsyncadd [#allocation3], %s12
      %s14 = smul.addr %s10, 2
      %s15 = smul.addr %s14, 64
      %s16 = scalar_lea.hbm %s0, %s15
      %s17 = sshll.u32 [#allocation2], 4
      %s18 = int_to_ptr.vmem [resolvable:$true] %s17
      %23 = dma.hbm_to_vmem [thread:$0]  %s16, 256, %s18, [#allocation3], 128, 128, 8
    $region5: #{tpu_custom_call.1} parent=1 // pred_fallthru
      _
    // Predicated region
    $region6: #{tpu_custom_call.1} parent=1 // pred_check
      _
    $region7: #{tpu_custom_call.1} parent=1 // pred_check_branch
      %25 = sbr.rel (0) target = $region9
    $region8: #{tpu_custom_call.1} parent=1 // pred_region
      %26 = dma.done [#allocation3], 256
    $region9: #{tpu_custom_call.1} parent=1 // pred_fallthru
      _
    %s27 = ssub.s32 0, 0
    %v28 = vld [vmem:[#allocation2] sm:$0xff]
    %v29 = vld [vmem:[#allocation2 + $0x8] sm:$0xff]
    %v32 = vlaneseq
    %v33 = vshrl.u32 %v32, 7
    %v34 = vsub.s32 3, %v33
    %v35 = vrot.slane %v28, %v34
    %v36 = vlaneseq
    %v37 = vshrl.u32 %v36, 7
    %v38 = vsub.s32 7, %v37
    %v39 = vrot.slane %v28, %v38
    %v40 = vlaneseq
    %v41 = vshrl.u32 %v40, 7
    %v42 = vsub.s32 3, %v41
    %v43 = vrot.slane %v29, %v42
    %v44 = vlaneseq
    %v45 = vshrl.u32 %v44, 7
    %v46 = vsub.s32 7, %v45
    %v47 = vrot.slane %v29, %v46
    %v52 = vlaneseq
    %v53 = vshrl.u32 %v52, 7
    %v54 = vsub.s32 2, %v53
    %v55 = vrot.slane %v28, %v54
    %v56 = vlaneseq
    %v57 = vshrl.u32 %v56, 7
    %v58 = vsub.s32 6, %v57
    %v59 = vrot.slane %v28, %v58
    %v60 = vlaneseq
    %v61 = vshrl.u32 %v60, 7
    %v62 = vsub.s32 2, %v61
    %v63 = vrot.slane %v29, %v62
    %v64 = vlaneseq
    %v65 = vshrl.u32 %v64, 7
    %v66 = vsub.s32 6, %v65
    %v67 = vrot.slane %v29, %v66
    %v72 = vlaneseq
    %v73 = vshrl.u32 %v72, 7
    %v74 = vsub.s32 1, %v73
    %v75 = vrot.slane %v28, %v74
    %v76 = vlaneseq
    %v77 = vshrl.u32 %v76, 7
    %v78 = vsub.s32 5, %v77
    %v79 = vrot.slane %v28, %v78
    %v80 = vlaneseq
    %v81 = vshrl.u32 %v80, 7
    %v82 = vsub.s32 1, %v81
    %v83 = vrot.slane %v29, %v82
    %v84 = vlaneseq
    %v85 = vshrl.u32 %v84, 7
    %v86 = vsub.s32 5, %v85
    %v87 = vrot.slane %v29, %v86
    %v92 = vlaneseq
    %v93 = vshrl.u32 %v92, 7
    %v94 = vsub.s32 0, %v93
    %v95 = vrot.slane %v28, %v94
    %v96 = vlaneseq
    %v97 = vshrl.u32 %v96, 7
    %v98 = vsub.s32 4, %v97
    %v99 = vrot.slane %v28, %v98
    %v100 = vlaneseq
    %v101 = vshrl.u32 %v100, 7
    %v102 = vsub.s32 0, %v101
    %v103 = vrot.slane %v29, %v102
    %v104 = vlaneseq
    %v105 = vshrl.u32 %v104, 7
    %v106 = vsub.s32 4, %v105
    %v107 = vrot.slane %v29, %v106
    %vm112 = vcmask 1040384
    %v113 = vsel %vm112, %v35, %v55
    %v114 = vsel %vm112, %v39, %v59
    %v115 = vsel %vm112, %v43, %v63
    %v116 = vsel %vm112, %v47, %v67
    %vm117 = vcmask 1041408
    %v118 = vsel %vm117, %v113, %v75
    %v119 = vsel %vm117, %v114, %v79
    %v120 = vsel %vm117, %v115, %v83
    %v121 = vsel %vm117, %v116, %v87
    %vm122 = vcmask 1042432
    %v123 = vsel %vm122, %v118, %v95
    %v124 = vsel %vm122, %v119, %v99
    %v125 = vsel %vm122, %v120, %v103
    %v126 = vsel %vm122, %v121, %v107
    %v131 = vcombine.low %v123, %v124
    %v132 = vcombine.low %v125, %v126
    %135 = vst [vmem:[#allocation5] sm:$0xff] %v131
    %136 = vst [vmem:[#allocation5 + $0x8] sm:$0xff] %v132
    // Predicated region
    $region10: #{tpu_custom_call.1} parent=1 // pred_check
      _
    $region11: #{tpu_custom_call.1} parent=1 // pred_check_branch
      %138 = sbr.rel (0) target = $region13
    $region12: #{tpu_custom_call.1} parent=1 // pred_region
      %s140 = ssub.s32 256, 256
      %141 = vsyncadd [#allocation4], %s140
      %s142 = sshll.u32 [#allocation5], 4
      %s143 = int_to_ptr.vmem [resolvable:$true] %s142
      %148 = dma.vmem_to_hbm [thread:$0]  %s143, 256, %s1, [#allocation4], 128, 128, 8
    $region13: #{tpu_custom_call.1} parent=1 // pred_fallthru
      _
    // Predicated region
    $region14: #{tpu_custom_call.1} parent=1 // pred_check
      _
    $region15: #{tpu_custom_call.1} parent=1 // pred_check_branch
      %150 = sbr.rel (0) target = $region17
    $region16: #{tpu_custom_call.1} parent=1 // pred_region
      %151 = dma.done [#allocation4], 256
    $region17: #{tpu_custom_call.1} parent=1 // pred_fallthru
      _
    %152 = vsyncpa [#allocation3], 1
    %153 = vsyncpa [#allocation4], 1

</llo_original>
